<compile_context>
chip_gen: v6e
topology: v6e:2x2x1
jax: 0.10.0
libtpu: 0.0.40
codegen_flags: <defaults>
</compile_context>

<pallas_src>
import functools

import jax
import jax.numpy as jnp
from jax.experimental import pallas as pl
from jax.experimental.pallas import tpu as pltpu


def _round_up(x: int, m: int) -> int:
    return (x + m - 1) // m * m


def _largest_divisor_tile(dim_padded: int, requested: int, unit: int = 128) -> int:
    """Largest multiple of `unit` that divides dim_padded and is <= requested."""
    n_units = dim_padded // unit
    best = unit
    for d in range(1, n_units + 1):
        if n_units % d == 0:
            cand = d * unit
            if cand <= requested:
                best = cand
    return min(best, dim_padded)


@functools.lru_cache(maxsize=1)
def _vmem_limit_bytes() -> int:
    """Scoped-VMEM limit with headroom, derived from the actual chip."""
    cap = 64 * 1024 * 1024  # conservative default = v7x per-TC VMEM
    try:
        cap = int(pltpu.get_tpu_info().vmem_capacity_bytes)
    except Exception:
        pass
    return max(32 * 1024 * 1024, min(cap * 3 // 4, 96 * 1024 * 1024))


def _footprint_bytes(tm: int, tk: int, tn: int, out_bytes: int) -> int:
    # Double-buffered x/w/bias/out tiles + f32 accumulator scratch.
    return (2 * tm * tk * 2          # x  bf16
            + 2 * tk * tn * 2        # w  bf16
            + 2 * 1 * tn * 4         # bias f32
            + 2 * tm * tn * out_bytes
            + tm * tn * 4)           # acc scratch


# ---------------------------------------------------------------------------
# Pallas kernels
# ---------------------------------------------------------------------------
def _linear_kernel_acc(x_ref, w_ref, b_ref, o_ref, acc_ref):
    """Multi-K-tile path: f32 VMEM accumulator, bias added once on last k."""
    k = pl.program_id(2)

    @pl.when(k == 0)
    def _init():
        acc_ref[...] = jnp.zeros_like(acc_ref)

    acc_ref[...] += jnp.dot(
        x_ref[...], w_ref[...], preferred_element_type=jnp.float32
    )

    @pl.when(k == pl.num_programs(2) - 1)
    def _finalize():
        o_ref[...] = (acc_ref[...] + b_ref[...]).astype(o_ref.dtype)


def _linear_kernel_single_k(x_ref, w_ref, b_ref, o_ref):
    """Single-K-tile path: no accumulator scratch, direct write (v5e friendly)."""
    o_ref[...] = (
        jnp.dot(x_ref[...], w_ref[...], preferred_element_type=jnp.float32)
        + b_ref[...]
    ).astype(o_ref.dtype)


# ---------------------------------------------------------------------------
# Wrapper
# ---------------------------------------------------------------------------
def prepare_linear_params(weight, bias):
    """Pad to 128-multiples and cast ONCE: W -> bf16 (Kp, Np), b -> f32 (1, Np)."""
    K, N = weight.shape
    Kp, Np = _round_up(K, 128), _round_up(N, 128)
    w_p = jnp.pad(weight, ((0, Kp - K), (0, Np - N))).astype(jnp.bfloat16)
    b_p = jnp.pad(bias.reshape(1, N), ((0, 0), (0, Np - N))).astype(jnp.float32)
    return w_p, b_p


def pallas_linear(x, w_p, b_p, *, n_out, tm=256, tn=512, tk=1024, out_dtype=None):
    """y = x @ W + b with pre-padded bf16 weight w_p (Kp, Np) and f32 bias b_p (1, Np).

    Only x is padded/cast per call.  bf16 MXU operands, f32 accumulate, f32
    bias add; output sliced back to (M, n_out) in out_dtype (default x.dtype).
    """
    M, K = x.shape
    Kp, Np = w_p.shape
    assert Kp >= K and Np >= n_out and b_p.shape == (1, Np)

    out_dtype = out_dtype or x.dtype
    out_bytes = jnp.dtype(out_dtype).itemsize

    # Tile selection: lane-dense, divisors of the (fixed) padded W dims.
    tm_eff = min(tm, _round_up(M, 16))            # bf16: 16 sublanes per vreg
    tk_eff = _largest_divisor_tile(Kp, tk)
    tn_eff = _largest_divisor_tile(Np, tn)
    Mp = _round_up(M, tm_eff)

    # Skinny-M: guarantee >=2 N-blocks so both v7x TensorCores get work.
    if Mp // tm_eff == 1 and Np // tn_eff < 2 and Np >= 256:
        tn_eff = _largest_divisor_tile(Np, Np // 2)

    # Keep double-buffered footprint under the per-generation VMEM budget.
    vmem_limit = _vmem_limit_bytes()
    budget = int(vmem_limit * 0.8)
    while _footprint_bytes(tm_eff, tk_eff, tn_eff, out_bytes) > budget and tk_eff > 128:
        tk_eff = _largest_divisor_tile(Kp, tk_eff // 2)
    while _footprint_bytes(tm_eff, tk_eff, tn_eff, out_bytes) > budget and tn_eff > 128:
        tn_eff = _largest_divisor_tile(Np, tn_eff // 2)

    # Pad/cast only the activations (the per-call cheap part).
    if (Mp, Kp) != (M, K) or x.dtype != jnp.bfloat16:
        xp = jnp.pad(x, ((0, Mp - M), (0, Kp - K))).astype(jnp.bfloat16)
    else:
        xp = x

    gm, gn, gk = Mp // tm_eff, Np // tn_eff, Kp // tk_eff

    if gk == 1:
        out = pl.pallas_call(
            _linear_kernel_single_k,
            out_shape=jax.ShapeDtypeStruct((Mp, Np), out_dtype),
            grid=(gm, gn),
            in_specs=[
                pl.BlockSpec((tm_eff, tk_eff), lambda i, j: (i, 0)),   # x tile
                pl.BlockSpec((tk_eff, tn_eff), lambda i, j: (0, j)),   # w tile
                pl.BlockSpec((1, tn_eff), lambda i, j: (0, j)),        # bias tile
            ],
            out_specs=pl.BlockSpec((tm_eff, tn_eff), lambda i, j: (i, j)),
            compiler_params=pltpu.CompilerParams(
                dimension_semantics=("parallel", "parallel"),
                vmem_limit_bytes=vmem_limit,
            ),
        )(xp, w_p, b_p)
    else:
        out = pl.pallas_call(
            _linear_kernel_acc,
            out_shape=jax.ShapeDtypeStruct((Mp, Np), out_dtype),
            grid=(gm, gn, gk),
            in_specs=[
                pl.BlockSpec((tm_eff, tk_eff), lambda i, j, k: (i, k)),
                pl.BlockSpec((tk_eff, tn_eff), lambda i, j, k: (k, j)),
                pl.BlockSpec((1, tn_eff), lambda i, j, k: (0, j)),
            ],
            out_specs=pl.BlockSpec((tm_eff, tn_eff), lambda i, j, k: (i, j)),
            scratch_shapes=[pltpu.VMEM((tm_eff, tn_eff), jnp.float32)],
            compiler_params=pltpu.CompilerParams(
                dimension_semantics=("parallel", "parallel", "arbitrary"),
                vmem_limit_bytes=vmem_limit,
            ),
        )(xp, w_p, b_p)

    return out[:M, :n_out]


# ---------------------------------------------------------------------------
# The wrapped inner module (stand-in for whatever `module` NullDDP wraps)
# ---------------------------------------------------------------------------
class PallasLinearModule:
    def __init__(self, in_features, out_features, key, *,
                 tm=256, tn=512, tk=1024, out_dtype=None):
        kw, kb = jax.random.split(key)
        self.in_features = in_features
        self.out_features = out_features
        self.weight = (
            jax.random.normal(kw, (in_features, out_features), jnp.float32)
            / jnp.sqrt(jnp.float32(in_features))
        )
        self.bias = jax.random.normal(kb, (out_features,), jnp.float32) * 0.01
        # Pad + cast once, outside the hot path.
        self.weight_p, self.bias_p = prepare_linear_params(self.weight, self.bias)
        self.tm, self.tn, self.tk = tm, tn, tk
        self.out_dtype = out_dtype

    def __call__(self, x):
        return pallas_linear(
            x, self.weight_p, self.bias_p,
            n_out=self.out_features,
            tm=self.tm, tn=self.tn, tk=self.tk,
            out_dtype=self.out_dtype,
        )


# ---------------------------------------------------------------------------
# NullDDP: exact forward semantics of the PyTorch module — pure delegation.
# ---------------------------------------------------------------------------
class NullDDP:
    def __init__(self, module, *args, **kwargs):
        self.module = module
        self.require_backward_grad_sync = False

    def __call__(self, *args, **kwargs):
        # forward(*args, **kwargs) -> self.module(*args, **kwargs)
        return self.module(*args, **kwargs)


def _check(x, mod, y):
    # Reference matching the kernel numerics (bf16 operands, f32 accumulate).
    x_bf = x.astype(jnp.bfloat16).astype(jnp.float32)
    w_bf = mod.weight.astype(jnp.bfloat16).astype(jnp.float32)
    ref_bf16 = x_bf @ w_bf + mod.bias
    assert jnp.allclose(y, ref_bf16, atol=1e-3, rtol=1e-3), "bf16-matched ref mismatch"
    # Loose check against the full-f32 reference (bf16 rounding of operands).
    ref_f32 = x @ mod.weight + mod.bias
    assert jnp.allclose(y, ref_f32, atol=5e-2, rtol=5e-2), "f32 ref mismatch"


if __name__ == "__main__":
    key = jax.random.PRNGKey(0)
    k_x1, k_m1, k_x2, k_m2 = jax.random.split(key, 4)

    # Case 1: skinny batch -> single-K-tile path (no accumulator scratch),
    # N split into >=2 lane-dense blocks so both v7x TensorCores get work.
    batch1, in1, out1 = 8, 512, 256
    x1 = jax.random.normal(k_x1, (batch1, in1), jnp.float32)
    mod1 = PallasLinearModule(in1, out1, k_m1)
    ddp1 = NullDDP(mod1)
    y1 = jax.block_until_ready(ddp1(x1))
    assert y1.shape == (batch1, out1)
    _check(x1, mod1, y1)

    # Case 2: multi-K-tile path (f32 VMEM accumulator), non-power-of-two N.
    batch2, in2, out2 = 32, 1024, 384
    x2 = jax.random.normal(k_x2, (batch2, in2), jnp.float32)
    mod2 = PallasLinearModule(in2, out2, k_m2, tk=512)
    ddp2 = NullDDP(mod2)
    y2 = jax.block_until_ready(ddp2(x2))
    assert y2.shape == (batch2, out2)
    _check(x2, mod2, y2)

    # NullDDP must be an exact pass-through of the wrapped module.
    assert jnp.array_equal(y1, jax.block_until_ready(mod1(x1)))

    print("KERNEL_OK")
</pallas_src>

<mosaic_0001>
module attributes {stable_mosaic.version = 11 : i64} {
  func.func @_linear_kernel_single_k(%arg0: i32, %arg1: i32, %arg2: memref<16x512xbf16, #tpu.memory_space<vmem>>, %arg3: memref<512x128xbf16, #tpu.memory_space<vmem>>, %arg4: memref<1x128xf32, #tpu.memory_space<vmem>>, %arg5: memref<16x128xf32, #tpu.memory_space<vmem>>) attributes {dimension_semantics = [#tpu.dimension_semantics<parallel>, #tpu.dimension_semantics<parallel>], iteration_bounds = array<i64: 1, 2>, scalar_prefetch = 0 : i64, scratch_operands = 0 : i64, tpu.core_type = #tpu.core_type<tc>, window_params = [{transform_indices = @transform_0, window_bounds = array<i64: 16, 512>}, {transform_indices = @transform_1, window_bounds = array<i64: 512, 128>}, {transform_indices = @transform_2, window_bounds = array<i64: 1, 128>}, {transform_indices = @transform_3, window_bounds = array<i64: 16, 128>}]} {
    %c0 = arith.constant 0 : index
    %c0_0 = arith.constant 0 : index
    %0 = vector.load %arg2[%c0, %c0_0] : memref<16x512xbf16, #tpu.memory_space<vmem>>, vector<16x512xbf16>
    %c0_1 = arith.constant 0 : index
    %c0_2 = arith.constant 0 : index
    %1 = vector.load %arg3[%c0_1, %c0_2] : memref<512x128xbf16, #tpu.memory_space<vmem>>, vector<512x128xbf16>
    %cst = arith.constant dense<0.000000e+00> : vector<16x128xf32>
    %2 = tpu.matmul %0, %1, %cst {dimension_numbers = #tpu.dot_dimension_numbers<[1], [0], [0], [1], [0, 0, 1, 1], [], []>} : vector<16x512xbf16>, vector<512x128xbf16>, vector<16x128xf32> -> vector<16x128xf32>
    %c0_3 = arith.constant 0 : index
    %c0_4 = arith.constant 0 : index
    %3 = vector.load %arg4[%c0_3, %c0_4] : memref<1x128xf32, #tpu.memory_space<vmem>>, vector<1x128xf32>
    %4 = vector.broadcast %3 : vector<1x128xf32> to vector<16x128xf32>
    %5 = arith.addf %2, %4 : vector<16x128xf32>
    %c0_5 = arith.constant 0 : index
    %c0_6 = arith.constant 0 : index
    %6 = vector.load %arg5[%c0_5, %c0_6] : memref<16x128xf32, #tpu.memory_space<vmem>>, vector<16x128xf32>
    tpu.vector_store %arg5[%c0_5, %c0_6], %5 {strides = array<i32>} : memref<16x128xf32, #tpu.memory_space<vmem>>, vector<16x128xf32>,
    return
  }
  func.func @transform_0(%arg0: i32, %arg1: i32) -> (i32, i32) {
    %c0_i32 = arith.constant 0 : i32
    %c0_i32_0 = arith.constant 0 : i32
    return %arg0, %c0_i32 : i32, i32
  }
  func.func @transform_1(%arg0: i32, %arg1: i32) -> (i32, i32) {
    %c0_i32 = arith.constant 0 : i32
    %c0_i32_0 = arith.constant 0 : i32
    return %c0_i32, %arg1 : i32, i32
  }
  func.func @transform_2(%arg0: i32, %arg1: i32) -> (i32, i32) {
    %c0_i32 = arith.constant 0 : i32
    %c0_i32_0 = arith.constant 0 : i32
    return %c0_i32, %arg1 : i32, i32
  }
  func.func @transform_3(%arg0: i32, %arg1: i32) -> (i32, i32) {
    %c0_i32 = arith.constant 0 : i32
    return %arg0, %arg1 : i32, i32
  }
}

</mosaic_0001>

<llo_original>
// kernel: tpu_custom_call.1
$region0: #{tpu_custom_call.1}
  #allocation0 [shape = 'u32[]', space=smem, size = 0x4, offset = 0x4, fixed_abs, tag = 'smem constant byte address 0x4 - core index']
  #allocation1 [shape = 'u32[144,128]{1,0:T(1,128)}', space=vmem, size = 0x12000, scoped, tag = 'internal scratch']
  %s0 = inlined_call_operand.hbm [shape: bf16[16,512], index: 0, kind: input, shape index: {}]
  %s1 = inlined_call_operand.hbm [shape: bf16[512,256], index: 1, kind: input, shape index: {}]
  %s2 = inlined_call_operand.vmem [shape: f32[1,256], index: 2, kind: input, shape index: {}]
  %s3 = inlined_call_operand.hbm [shape: f32[16,256], index: 3, kind: output, shape index: {}]
  %s4 = sld [smem:[#allocation0]]
  $region53: #{tpu_custom_call.1} parent=0
    _
  %s6 = ssub.s32 1, %s4
  %s7 = scalar_select 0, %s6, %s4
  $region1: #{tpu_custom_call.1} parent=0
    #allocation2 [shape = 'u8[16384]{0}', space=vmem, size = 0x4000, scoped, tag = 'input window, operand 0, single buffered']
    #allocation3 [shape = 's32[2]{0}', space=sflag, size = 0x8, scoped, tag = 'scoped memory for tpu_custom_call.1']
    #allocation4 [shape = 's32[2]{0}', space=sflag, size = 0x8, scoped, tag = 'scoped memory for tpu_custom_call.1']
    #allocation5 [shape = 'u8[262144]{0}', space=vmem, size = 0x40000, scoped, tag = 'input window, operand 1']
    #allocation6 [shape = 's32[2]{0}', space=sflag, size = 0x8, scoped, tag = 'scoped memory for tpu_custom_call.1']
    #allocation7 [shape = 'u8[16384]{0}', space=vmem, size = 0x4000, scoped, tag = 'output window, operand 0']
    %8 = vsyncpa [#allocation3], 0
    %9 = vsyncpa [#allocation6], 0
    %s10 = scalar_lea.sflag [#allocation6], 1
    %11 = vsyncpa %s10, 0
    %12 = vsyncpa [#allocation4], 0
    %s13 = scalar_lea.sflag [#allocation4], 1
    %14 = vsyncpa %s13, 0
    loop: start=0, step=1, limit=4
    $region2: #{tpu_custom_call.1} parent=1 // loop_pre_header
      _
    $region3: #{tpu_custom_call.1} parent=1 // loop_header
      %s16 = sphi 0, %s20
      %p17 = scmp.ge.s32.totalorder %s16, 4
      %s23 = sphi 0, %s35
      %s24 = sphi 0, %s31
      %s25 = sphi 0, %s23
      %s26 = sphi 0, %s24
      %s27 = sphi 0, %s25
      %s28 = sphi 0, %s26
      %s38 = sphi 0, %s40
      %s41 = sphi 0, %s38
      %s42 = sphi 0, %s41
      %s58 = sphi 0, %s42
      %s64 = sphi 0, %s66
      %s67 = sphi 0, %s64
      %s68 = sphi 0, %s67
      %s84 = sphi 0, %s68
      %s90 = sphi 0, %s92
      %s93 = sphi 0, %s90
      %s94 = sphi 0, %s93
      %s110 = sphi 0, %s94
      %s118 = sphi 0, %s120
      %s121 = sphi 0, %s118
      %s122 = sphi 0, %s121
      %s138 = sphi 0, %s122
    $region4: #{tpu_custom_call.1} parent=1 // loop_header_branch
      %19 = sbr.rel (%p17) target = $region8
    $region5: #{tpu_custom_call.1} parent=1 // loop_body
      %s21 = ssub.s32 %s16, 1
      %s22 = ssub.s32 %s16, 2
      %s29 = sadd.s32 1, %s24
      %p30 = scmp.ge.s32.totalorder %s29, 2
      %s31 = scalar_select %p30, 0, %s29
      %s32 = sadd.s32 1, %s23
      %s33 = scalar_select %p30, %s32, %s23
      %p34 = scmp.ge.s32.totalorder %s33, 1
      %s35 = scalar_select %p34, 0, %s33
      %s36 = ssub.s32 %s23, %s35
      %p37 = scmp.eq.s32.totalorder %s36, 0
      %s39 = sadd.s32 %s38, 1
      %s40 = scalar_select %p37, %s38, %s39
      %p43 = pneg %p37
      %p44 = scmp.eq.s32.totalorder %s16, 1
      %p45 = por %p43, %p44
      %p46 = scmp.ne.s32.totalorder %s38, %s41
      %p47 = scmp.eq.s32.totalorder %s16, 0
      %p48 = por %p46, %p47
      %p49 = scmp.ne.s32.totalorder %s38, %s41
      %p50 = scmp.eq.s32.totalorder %s21, 1
      %p51 = por %p49, %p50
      %p52 = scmp.ne.s32.totalorder %s41, %s42
      %p53 = scmp.eq.s32.totalorder %s21, 0
      %p54 = por %p52, %p53
      %p55 = scmp.ne.s32.totalorder %s41, %s42
      %p56 = scmp.eq.s32.totalorder %s22, 1
      %p57 = por %p55, %p56
      %p59 = scmp.ne.s32.totalorder %s42, %s58
      %p60 = scmp.eq.s32.totalorder %s22, 0
      %p61 = por %p59, %p60
      %s62 = ssub.s32 %s24, %s31
      %p63 = scmp.eq.s32.totalorder %s62, 0
      %s65 = sadd.s32 %s64, 1
      %s66 = scalar_select %p63, %s64, %s65
      %p69 = pneg %p63
      %p70 = scmp.eq.s32.totalorder %s16, 1
      %p71 = por %p69, %p70
      %p72 = scmp.ne.s32.totalorder %s64, %s67
      %p73 = scmp.eq.s32.totalorder %s16, 0
      %p74 = por %p72, %p73
      %p75 = scmp.ne.s32.totalorder %s64, %s67
      %p76 = scmp.eq.s32.totalorder %s21, 1
      %p77 = por %p75, %p76
      %p78 = scmp.ne.s32.totalorder %s67, %s68
      %p79 = scmp.eq.s32.totalorder %s21, 0
      %p80 = por %p78, %p79
      %p81 = scmp.ne.s32.totalorder %s67, %s68
      %p82 = scmp.eq.s32.totalorder %s22, 1
      %p83 = por %p81, %p82
      %p85 = scmp.ne.s32.totalorder %s68, %s84
      %p86 = scmp.eq.s32.totalorder %s22, 0
      %p87 = por %p85, %p86
      %s88 = ssub.s32 %s24, %s31
      %p89 = scmp.eq.s32.totalorder %s88, 0
      %s91 = sadd.s32 %s90, 1
      %s92 = scalar_select %p89, %s90, %s91
      %p95 = pneg %p89
      %p96 = scmp.eq.s32.totalorder %s16, 1
      %p97 = por %p95, %p96
      %p98 = scmp.ne.s32.totalorder %s90, %s93
      %p99 = scmp.eq.s32.totalorder %s16, 0
      %p100 = por %p98, %p99
      %p101 = scmp.ne.s32.totalorder %s90, %s93
      %p102 = scmp.eq.s32.totalorder %s21, 1
      %p103 = por %p101, %p102
      %p104 = scmp.ne.s32.totalorder %s93, %s94
      %p105 = scmp.eq.s32.totalorder %s21, 0
      %p106 = por %p104, %p105
      %p107 = scmp.ne.s32.totalorder %s93, %s94
      %p108 = scmp.eq.s32.totalorder %s22, 1
      %p109 = por %p107, %p108
      %p111 = scmp.ne.s32.totalorder %s94, %s110
      %p112 = scmp.eq.s32.totalorder %s22, 0
      %p113 = por %p111, %p112
      %s114 = ssub.s32 %s23, %s35
      %s115 = ssub.s32 %s24, %s31
      %s116 = sor.u32 %s114, %s115
      %p117 = scmp.eq.s32.totalorder %s116, 0
      %s119 = sadd.s32 %s118, 1
      %s120 = scalar_select %p117, %s118, %s119
      %p123 = pneg %p117
      %p124 = scmp.eq.s32.totalorder %s16, 1
      %p125 = por %p123, %p124
      %p126 = scmp.ne.s32.totalorder %s118, %s121
      %p127 = scmp.eq.s32.totalorder %s16, 0
      %p128 = por %p126, %p127
      %p129 = scmp.ne.s32.totalorder %s118, %s121
      %p130 = scmp.eq.s32.totalorder %s21, 1
      %p131 = por %p129, %p130
      %p132 = scmp.ne.s32.totalorder %s121, %s122
      %p133 = scmp.eq.s32.totalorder %s21, 0
      %p134 = por %p132, %p133
      %p135 = scmp.ne.s32.totalorder %s121, %s122
      %p136 = scmp.eq.s32.totalorder %s22, 1
      %p137 = por %p135, %p136
      %p139 = scmp.ne.s32.totalorder %s122, %s138
      %p140 = scmp.eq.s32.totalorder %s22, 0
      %p141 = por %p139, %p140
      %p142 = scmp.le.s32.totalorder 1, %s16
      %p143 = scmp.lt.s32.totalorder %s16, 3
      %p144 = pnand %p142, %p143
      %p145 = pneg %p144
      // Predicated region
      $region9: #{tpu_custom_call.1} parent=5 // pred_check
        _
      $region10: #{tpu_custom_call.1} parent=5 // pred_check_branch
        %147 = sbr.rel (%p144) target = $region12
      $region11: #{tpu_custom_call.1} parent=5 // pred_region
        %s148 = ssub.s32 %s16, 1
        // Predicated region
        $region13: #{tpu_custom_call.1} parent=11 // pred_check
          %p149 = pneg %p54
        $region14: #{tpu_custom_call.1} parent=11 // pred_check_branch
          %151 = sbr.rel (%p149) target = $region16
        $region15: #{tpu_custom_call.1} parent=11 // pred_region
          %s152 = smul.u32 2, %s25
          %s154 = ssub.s32 512, 512
          %155 = vsyncadd [#allocation3], %s154
          %s156 = smul.addr %s152, 4
          %s157 = smul.addr %s156, 64
          %s158 = scalar_lea.hbm %s0, %s157
          %s159 = sshll.u32 [#allocation2], 4
          %s160 = int_to_ptr.vmem [resolvable:$true] %s159
          %165 = dma.hbm_to_vmem [thread:$0]  %s158, 512, %s160, [#allocation3], 256, 256, 16
        $region16: #{tpu_custom_call.1} parent=11 // pred_fallthru
          _
      $region12: #{tpu_custom_call.1} parent=5 // pred_fallthru
        _
      %p166 = scmp.lt.s32.totalorder %s16, 2
      // Predicated region
      $region17: #{tpu_custom_call.1} parent=5 // pred_check
        %p167 = pneg %p166
      $region18: #{tpu_custom_call.1} parent=5 // pred_check_branch
        %169 = sbr.rel (%p167) target = $region20
      $region19: #{tpu_custom_call.1} parent=5 // pred_region
        // Predicated region
        $region21: #{tpu_custom_call.1} parent=19 // pred_check
          %p170 = pneg %p74
        $region22: #{tpu_custom_call.1} parent=19 // pred_check_branch
          %172 = sbr.rel (%p170) target = $region24
        $region23: #{tpu_custom_call.1} parent=19 // pred_region
          %s173 = sand.u32 %s64, 1
          %s174 = scalar_lea.sflag [#allocation6], %s173
          %s175 = sand.u32 %s64, 1
          %s176 = smul.addr %s175, 256
          %s177 = scalar_lea.vmem [#allocation5], %s176
          %s179 = ssub.s32 4096, 4096
          %180 = vsyncadd %s174, %s179
          %s181 = smul.addr %s24, 64
          %s182 = scalar_lea.hbm %s1, %s181
          %s183 = sshll.u32 %s177, 4
          %s184 = int_to_ptr.vmem [resolvable:$true] %s183
          %189 = dma.hbm_to_vmem [thread:$0]  %s182, 4096, %s184, %s174, 128, 64, 4
        $region24: #{tpu_custom_call.1} parent=19 // pred_fallthru
          _
        // Predicated region
        $region25: #{tpu_custom_call.1} parent=19 // pred_check
          %p190 = pneg %p100
        $region26: #{tpu_custom_call.1} parent=19 // pred_check_branch
          %192 = sbr.rel (%p190) target = $region28
        $region27: #{tpu_custom_call.1} parent=19 // pred_region
          %p193 = scmp.lt.s32.totalorder %s24, 1
          %s194 = scalar_select %p193, %s24, 1
          %s195 = scalar_lea.vmem %s2, %s194
        $region28: #{tpu_custom_call.1} parent=19 // pred_fallthru
          _
      $region20: #{tpu_custom_call.1} parent=5 // pred_fallthru
        _
      %p196 = scmp.le.s32.totalorder 1, %s16
      %p197 = scmp.lt.s32.totalorder %s16, 3
      %p198 = pnand %p196, %p197
      %p199 = pneg %p198
      // Predicated region
      $region29: #{tpu_custom_call.1} parent=5 // pred_check
        _
      $region30: #{tpu_custom_call.1} parent=5 // pred_check_branch
        %201 = sbr.rel (%p198) target = $region32
      $region31: #{tpu_custom_call.1} parent=5 // pred_region
        %s202 = ssub.s32 %s16, 1
        // Predicated region
        $region33: #{tpu_custom_call.1} parent=31 // pred_check
          %p203 = pneg %p54
        $region34: #{tpu_custom_call.1} parent=31 // pred_check_branch
          %205 = sbr.rel (%p203) target = $region36
        $region35: #{tpu_custom_call.1} parent=31 // pred_region
          %206 = dma.done [#allocation3], 512
        $region36: #{tpu_custom_call.1} parent=31 // pred_fallthru
          _
        %s207 = sand.u32 %s67, 1
        %s208 = scalar_lea.sflag [#allocation6], %s207
        %s209 = sand.u32 %s67, 1
        %s210 = smul.addr %s209, 256
        %s211 = scalar_lea.vmem [#allocation5], %s210
        // Predicated region
        $region37: #{tpu_custom_call.1} parent=31 // pred_check
          %p212 = pneg %p80
        $region38: #{tpu_custom_call.1} parent=31 // pred_check_branch
          %214 = sbr.rel (%p212) target = $region40
        $region39: #{tpu_custom_call.1} parent=31 // pred_region
          %215 = dma.done %s208, 4096
        $region40: #{tpu_custom_call.1} parent=31 // pred_fallthru
          _
        %p216 = pneg %p54
        %p217 = pneg %p51
        %s218 = sand.u32 %s67, 1
        %s219 = scalar_lea.sflag [#allocation6], %s218
        %s220 = sand.u32 %s67, 1
        %s221 = smul.addr %s220, 256
        %s222 = scalar_lea.vmem [#allocation5], %s221
        %p223 = pneg %p80
        %p224 = pneg %p77
        %p225 = scmp.lt.s32.totalorder %s26, 1
        %s226 = scalar_select %p225, %s26, 1
        %s227 = scalar_lea.vmem %s2, %s226
        %p228 = pneg %p106
        %p229 = pneg %p103
        %p230 = pneg %p134
        %p231 = pneg %p131
        %s232 = sand.u32 %s121, 1
        %s233 = scalar_lea.sflag [#allocation4], %s232
        %s234 = sand.u32 %s121, 1
        %s235 = smul.addr %s234, 16
        %s236 = scalar_lea.vmem [#allocation7], %s235
        %s237 = smul.u32 2, %s25
        %p238 = scmp.lt.s32.totalorder %s26, 1
        %s239 = scalar_select %p238, %s26, 1
        %s240 = scalar_lea.vmem %s2, %s239
        %s241 = smul.u32 2, %s25
        %v243 = vld [vmem:[#allocation2] sm:$0xff]
        %v244 = vld [vmem:[#allocation2 + $0x8] sm:$0xff]
        %v245 = vld [vmem:[#allocation2 + $0x10] sm:$0xff]
        %v246 = vld [vmem:[#allocation2 + $0x18] sm:$0xff]
        %v247 = vld [vmem:[%s211] sm:$0xf]
        %v248 = vld [vmem:[%s211 + $0x4] sm:$0xf]
        %v249 = vld [vmem:[%s211 + $0x8] sm:$0xf]
        %v250 = vld [vmem:[%s211 + $0xc] sm:$0xf]
        %v251 = vld [vmem:[%s211 + $0x10] sm:$0xf]
        %v252 = vld [vmem:[%s211 + $0x14] sm:$0xf]
        %v253 = vld [vmem:[%s211 + $0x18] sm:$0xf]
        %v254 = vld [vmem:[%s211 + $0x1c] sm:$0xf]
        %v255 = vld [vmem:[%s211 + $0x20] sm:$0xf]
        %v256 = vld [vmem:[%s211 + $0x24] sm:$0xf]
        %v257 = vld [vmem:[%s211 + $0x28] sm:$0xf]
        %v258 = vld [vmem:[%s211 + $0x2c] sm:$0xf]
        %v259 = vld [vmem:[%s211 + $0x30] sm:$0xf]
        %v260 = vld [vmem:[%s211 + $0x34] sm:$0xf]
        %v261 = vld [vmem:[%s211 + $0x38] sm:$0xf]
        %v262 = vld [vmem:[%s211 + $0x3c] sm:$0xf]
        %v263 = vld [vmem:[%s211 + $0x40] sm:$0xf]
        %v264 = vld [vmem:[%s211 + $0x44] sm:$0xf]
        %v265 = vld [vmem:[%s211 + $0x48] sm:$0xf]
        %v266 = vld [vmem:[%s211 + $0x4c] sm:$0xf]
        %v267 = vld [vmem:[%s211 + $0x50] sm:$0xf]
        %v268 = vld [vmem:[%s211 + $0x54] sm:$0xf]
        %v269 = vld [vmem:[%s211 + $0x58] sm:$0xf]
        %v270 = vld [vmem:[%s211 + $0x5c] sm:$0xf]
        %v271 = vld [vmem:[%s211 + $0x60] sm:$0xf]
        %v272 = vld [vmem:[%s211 + $0x64] sm:$0xf]
        %v273 = vld [vmem:[%s211 + $0x68] sm:$0xf]
        %v274 = vld [vmem:[%s211 + $0x6c] sm:$0xf]
        %v275 = vld [vmem:[%s211 + $0x70] sm:$0xf]
        %v276 = vld [vmem:[%s211 + $0x74] sm:$0xf]
        %v277 = vld [vmem:[%s211 + $0x78] sm:$0xf]
        %v278 = vld [vmem:[%s211 + $0x7c] sm:$0xf]
        %v279 = vld [vmem:[%s211 + $0x80] sm:$0xf]
        %v280 = vld [vmem:[%s211 + $0x84] sm:$0xf]
        %v281 = vld [vmem:[%s211 + $0x88] sm:$0xf]
        %v282 = vld [vmem:[%s211 + $0x8c] sm:$0xf]
        %v283 = vld [vmem:[%s211 + $0x90] sm:$0xf]
        %v284 = vld [vmem:[%s211 + $0x94] sm:$0xf]
        %v285 = vld [vmem:[%s211 + $0x98] sm:$0xf]
        %v286 = vld [vmem:[%s211 + $0x9c] sm:$0xf]
        %v287 = vld [vmem:[%s211 + $0xa0] sm:$0xf]
        %v288 = vld [vmem:[%s211 + $0xa4] sm:$0xf]
        %v289 = vld [vmem:[%s211 + $0xa8] sm:$0xf]
        %v290 = vld [vmem:[%s211 + $0xac] sm:$0xf]
        %v291 = vld [vmem:[%s211 + $0xb0] sm:$0xf]
        %v292 = vld [vmem:[%s211 + $0xb4] sm:$0xf]
        %v293 = vld [vmem:[%s211 + $0xb8] sm:$0xf]
        %v294 = vld [vmem:[%s211 + $0xbc] sm:$0xf]
        %v295 = vld [vmem:[%s211 + $0xc0] sm:$0xf]
        %v296 = vld [vmem:[%s211 + $0xc4] sm:$0xf]
        %v297 = vld [vmem:[%s211 + $0xc8] sm:$0xf]
        %v298 = vld [vmem:[%s211 + $0xcc] sm:$0xf]
        %v299 = vld [vmem:[%s211 + $0xd0] sm:$0xf]
        %v300 = vld [vmem:[%s211 + $0xd4] sm:$0xf]
        %v301 = vld [vmem:[%s211 + $0xd8] sm:$0xf]
        %v302 = vld [vmem:[%s211 + $0xdc] sm:$0xf]
        %v303 = vld [vmem:[%s211 + $0xe0] sm:$0xf]
        %v304 = vld [vmem:[%s211 + $0xe4] sm:$0xf]
        %v305 = vld [vmem:[%s211 + $0xe8] sm:$0xf]
        %v306 = vld [vmem:[%s211 + $0xec] sm:$0xf]
        %v307 = vld [vmem:[%s211 + $0xf0] sm:$0xf]
        %v308 = vld [vmem:[%s211 + $0xf4] sm:$0xf]
        %v309 = vld [vmem:[%s211 + $0xf8] sm:$0xf]
        %v310 = vld [vmem:[%s211 + $0xfc] sm:$0xf]
        %v311 = vld [vmem:[%s240] sm:$0x1]
        %v313 = vlaneseq
        %v314 = vshrl.u32 %v313, 7
        %v315 = vsub.s32 0, %v314
        %v316 = vrot.slane %v311, %v315
        %v322 = vunpack.c.l.b16 %v243
        %v323 = vunpack.c.h.b16 %v243
        %v324 = vunpack.c.l.b16 %v244
        %v325 = vunpack.c.h.b16 %v244
        %v326 = vunpack.c.l.b16 %v245
        %v327 = vunpack.c.h.b16 %v245
        %v328 = vunpack.c.l.b16 %v246
        %v329 = vunpack.c.h.b16 %v246
        %v330 = vpack.c.b16 %v326, %v322
        %v331 = vpack.c.b16 %v327, %v323
        %v332 = vpack.c.b16 %v328, %v324
        %v333 = vpack.c.b16 %v329, %v325
        %v402 = vunpack.c.l.b16 %v247
        %v403 = vunpack.c.l.b16 %v248
        %v404 = vunpack.c.l.b16 %v249
        %v405 = vunpack.c.l.b16 %v250
        %v406 = vunpack.c.l.b16 %v251
        %v407 = vunpack.c.l.b16 %v252
        %v408 = vunpack.c.l.b16 %v253
        %v409 = vunpack.c.l.b16 %v254
        %v410 = vunpack.c.l.b16 %v255
        %v411 = vunpack.c.l.b16 %v256
        %v412 = vunpack.c.l.b16 %v257
        %v413 = vunpack.c.l.b16 %v258
        %v414 = vunpack.c.l.b16 %v259
        %v415 = vunpack.c.l.b16 %v260
        %v416 = vunpack.c.l.b16 %v261
        %v417 = vunpack.c.l.b16 %v262
        %v418 = vunpack.c.l.b16 %v263
        %v419 = vunpack.c.l.b16 %v264
        %v420 = vunpack.c.l.b16 %v265
        %v421 = vunpack.c.l.b16 %v266
        %v422 = vunpack.c.l.b16 %v267
        %v423 = vunpack.c.l.b16 %v268
        %v424 = vunpack.c.l.b16 %v269
        %v425 = vunpack.c.l.b16 %v270
        %v426 = vunpack.c.l.b16 %v271
        %v427 = vunpack.c.l.b16 %v272
        %v428 = vunpack.c.l.b16 %v273
        %v429 = vunpack.c.l.b16 %v274
        %v430 = vunpack.c.l.b16 %v275
        %v431 = vunpack.c.l.b16 %v276
        %v432 = vunpack.c.l.b16 %v277
        %v433 = vunpack.c.l.b16 %v278
        %v434 = vunpack.c.l.b16 %v279
        %v435 = vunpack.c.l.b16 %v280
        %v436 = vunpack.c.l.b16 %v281
        %v437 = vunpack.c.l.b16 %v282
        %v438 = vunpack.c.l.b16 %v283
        %v439 = vunpack.c.l.b16 %v284
        %v440 = vunpack.c.l.b16 %v285
        %v441 = vunpack.c.l.b16 %v286
        %v442 = vunpack.c.l.b16 %v287
        %v443 = vunpack.c.l.b16 %v288
        %v444 = vunpack.c.l.b16 %v289
        %v445 = vunpack.c.l.b16 %v290
        %v446 = vunpack.c.l.b16 %v291
        %v447 = vunpack.c.l.b16 %v292
        %v448 = vunpack.c.l.b16 %v293
        %v449 = vunpack.c.l.b16 %v294
        %v450 = vunpack.c.l.b16 %v295
        %v451 = vunpack.c.l.b16 %v296
        %v452 = vunpack.c.l.b16 %v297
        %v453 = vunpack.c.l.b16 %v298
        %v454 = vunpack.c.l.b16 %v299
        %v455 = vunpack.c.l.b16 %v300
        %v456 = vunpack.c.l.b16 %v301
        %v457 = vunpack.c.l.b16 %v302
        %v458 = vunpack.c.l.b16 %v303
        %v459 = vunpack.c.l.b16 %v304
        %v460 = vunpack.c.l.b16 %v305
        %v461 = vunpack.c.l.b16 %v306
        %v462 = vunpack.c.l.b16 %v307
        %v463 = vunpack.c.l.b16 %v308
        %v464 = vunpack.c.l.b16 %v309
        %v465 = vunpack.c.l.b16 %v310
        %v466 = vpack.c.b16 %v403, %v402
        %v467 = vpack.c.b16 %v405, %v404
        %v468 = vpack.c.b16 %v407, %v406
        %v469 = vpack.c.b16 %v409, %v408
        %v470 = vpack.c.b16 %v411, %v410
        %v471 = vpack.c.b16 %v413, %v412
        %v472 = vpack.c.b16 %v415, %v414
        %v473 = vpack.c.b16 %v417, %v416
        %v474 = vpack.c.b16 %v419, %v418
        %v475 = vpack.c.b16 %v421, %v420
        %v476 = vpack.c.b16 %v423, %v422
        %v477 = vpack.c.b16 %v425, %v424
        %v478 = vpack.c.b16 %v427, %v426
        %v479 = vpack.c.b16 %v429, %v428
        %v480 = vpack.c.b16 %v431, %v430
        %v481 = vpack.c.b16 %v433, %v432
        %v482 = vpack.c.b16 %v435, %v434
        %v483 = vpack.c.b16 %v437, %v436
        %v484 = vpack.c.b16 %v439, %v438
        %v485 = vpack.c.b16 %v441, %v440
        %v486 = vpack.c.b16 %v443, %v442
        %v487 = vpack.c.b16 %v445, %v444
        %v488 = vpack.c.b16 %v447, %v446
        %v489 = vpack.c.b16 %v449, %v448
        %v490 = vpack.c.b16 %v451, %v450
        %v491 = vpack.c.b16 %v453, %v452
        %v492 = vpack.c.b16 %v455, %v454
        %v493 = vpack.c.b16 %v457, %v456
        %v494 = vpack.c.b16 %v459, %v458
        %v495 = vpack.c.b16 %v461, %v460
        %v496 = vpack.c.b16 %v463, %v462
        %v497 = vpack.c.b16 %v465, %v464
        %530 = vmatprep.subr.bf16.mxu0 0
        %531 = vmatpush1.bf16.msra.mxu0 %v473
        %532 = vmatprep.subr.bf16.mxu0 0
        %533 = vmatpush1.bf16.msra.mxu0 %v472
        %534 = vmatprep.subr.bf16.mxu0 0
        %535 = vmatpush1.bf16.msra.mxu0 %v471
        %536 = vmatprep.subr.bf16.mxu0 0
        %537 = vmatpush1.bf16.msra.mxu0 %v470
        %538 = vmatprep.subr.bf16.mxu0 0
        %539 = vmatpush1.bf16.msra.mxu0 %v469
        %540 = vmatprep.subr.bf16.mxu0 0
        %541 = vmatpush1.bf16.msra.mxu0 %v468
        %542 = vmatprep.subr.bf16.mxu0 0
        %543 = vmatpush1.bf16.msra.mxu0 %v467
        %544 = vmatprep.subr.bf16.mxu0 0
        %545 = vmatpush1.bf16.msra.mxu0 %v466
        %546 = vmatprep.subr.bf16.mxu0 0
        %547 = vmatpush2.bf16.msra.mxu0 %v481
        %548 = vmatprep.subr.bf16.mxu0 0
        %549 = vmatpush2.bf16.msra.mxu0 %v480
        %550 = vmatprep.subr.bf16.mxu0 0
        %551 = vmatpush2.bf16.msra.mxu0 %v479
        %552 = vmatprep.subr.bf16.mxu0 0
        %553 = vmatpush2.bf16.msra.mxu0 %v478
        %554 = vmatprep.subr.bf16.mxu0 0
        %555 = vmatpush2.bf16.msra.mxu0 %v477
        %556 = vmatprep.subr.bf16.mxu0 0
        %557 = vmatpush2.bf16.msra.mxu0 %v476
        %558 = vmatprep.subr.bf16.mxu0 0
        %559 = vmatpush2.bf16.msra.mxu0 %v475
        %560 = vmatprep.subr.bf16.mxu0 0
        %561 = vmatpush2.bf16.msra.mxu0 %v474
        %562 = vmatprep.mubr.bf16.mxu0 %v331
        %563 = vmatmul.mubr.bf16.gmra.mxu0 %v330
        %v564 = vpop.f32.mrf.mxu0
        %v565 = vadd.f32 %v316, %v564
        %v566 = vpop.f32.mrf.mxu0
        %v567 = vpop.f32.mrf.mxu0
        %v568 = vadd.f32 %v316, %v567
        %v569 = vpop.f32.mrf.mxu0
        %570 = vdwg.mxu0
        %571 = vmatprep.subr.bf16.mxu0 0
        %572 = vmatpush1.bf16.msra.mxu0 %v489
        %573 = vmatprep.subr.bf16.mxu0 0
        %574 = vmatpush1.bf16.msra.mxu0 %v488
        %575 = vmatprep.subr.bf16.mxu0 0
        %576 = vmatpush1.bf16.msra.mxu0 %v487
        %577 = vmatprep.subr.bf16.mxu0 0
        %578 = vmatpush1.bf16.msra.mxu0 %v486
        %579 = vmatprep.subr.bf16.mxu0 0
        %580 = vmatpush1.bf16.msra.mxu0 %v485
        %581 = vmatprep.subr.bf16.mxu0 0
        %582 = vmatpush1.bf16.msra.mxu0 %v484
        %583 = vmatprep.subr.bf16.mxu0 0
        %584 = vmatpush1.bf16.msra.mxu0 %v483
        %585 = vmatprep.subr.bf16.mxu0 0
        %586 = vmatpush1.bf16.msra.mxu0 %v482
        %587 = vmatprep.subr.bf16.mxu0 0
        %588 = vmatpush2.bf16.msra.mxu0 %v497
        %589 = vmatprep.subr.bf16.mxu0 0
        %590 = vmatpush2.bf16.msra.mxu0 %v496
        %591 = vmatprep.subr.bf16.mxu0 0
        %592 = vmatpush2.bf16.msra.mxu0 %v495
        %593 = vmatprep.subr.bf16.mxu0 0
        %594 = vmatpush2.bf16.msra.mxu0 %v494
        %595 = vmatprep.subr.bf16.mxu0 0
        %596 = vmatpush2.bf16.msra.mxu0 %v493
        %597 = vmatprep.subr.bf16.mxu0 0
        %598 = vmatpush2.bf16.msra.mxu0 %v492
        %599 = vmatprep.subr.bf16.mxu0 0
        %600 = vmatpush2.bf16.msra.mxu0 %v491
        %601 = vmatprep.subr.bf16.mxu0 0
        %602 = vmatpush2.bf16.msra.mxu0 %v490
        %603 = vmatprep.mubr.bf16.mxu0 %v333
        %604 = vmatmul.mubr.bf16.gmra.mxu0 %v332
        %v605 = vpop.f32.mrf.mxu0
        %v606 = vadd.f32 %v565, %v605
        %v607 = vpop.f32.mrf.mxu0
        %v608 = vpop.f32.mrf.mxu0
        %v609 = vadd.f32 %v568, %v608
        %v610 = vpop.f32.mrf.mxu0
        %611 = vdwg.mxu0
        %612 = vst [vmem:[%s236] sm:$0xff] %v606
        %613 = vst [vmem:[%s236 + $0x8] sm:$0xff] %v609
        %s614 = sand.u32 %s121, 1
        %s615 = scalar_lea.sflag [#allocation4], %s614
        %s616 = sand.u32 %s121, 1
        %s617 = smul.addr %s616, 16
        %s618 = scalar_lea.vmem [#allocation7], %s617
        // Predicated region
        $region41: #{tpu_custom_call.1} parent=31 // pred_check
          %p619 = pneg %p131
        $region42: #{tpu_custom_call.1} parent=31 // pred_check_branch
          %621 = sbr.rel (%p619) target = $region44
        $region43: #{tpu_custom_call.1} parent=31 // pred_region
          %s622 = smul.u32 2, %s25
          %s624 = ssub.s32 256, 256
          %625 = vsyncadd %s615, %s624
          %s626 = smul.addr %s622, 2
          %s627 = sadd.s32 %s26, %s626
          %s628 = smul.addr %s627, 128
          %s629 = scalar_lea.hbm %s3, %s628
          %s630 = sshll.u32 %s618, 4
          %s631 = int_to_ptr.vmem [resolvable:$true] %s630
          %636 = dma.vmem_to_hbm [thread:$0]  %s631, 256, %s629, %s615, 128, 256, 8
        $region44: #{tpu_custom_call.1} parent=31 // pred_fallthru
          _
      $region32: #{tpu_custom_call.1} parent=5 // pred_fallthru
        _
      %p637 = scmp.le.s32.totalorder 2, %s16
      // Predicated region
      $region45: #{tpu_custom_call.1} parent=5 // pred_check
        %p638 = pneg %p637
      $region46: #{tpu_custom_call.1} parent=5 // pred_check_branch
        %640 = sbr.rel (%p638) target = $region48
      $region47: #{tpu_custom_call.1} parent=5 // pred_region
        %s641 = ssub.s32 %s16, 2
        // Predicated region
        $region49: #{tpu_custom_call.1} parent=47 // pred_check
          %p642 = pneg %p137
        $region50: #{tpu_custom_call.1} parent=47 // pred_check_branch
          %644 = sbr.rel (%p642) target = $region52
        $region51: #{tpu_custom_call.1} parent=47 // pred_region
          %s645 = sand.u32 %s122, 1
          %s646 = scalar_lea.sflag [#allocation4], %s645
          %s647 = sand.u32 %s122, 1
          %s648 = smul.addr %s647, 16
          %s649 = scalar_lea.vmem [#allocation7], %s648
          %650 = dma.done %s646, 256
        $region52: #{tpu_custom_call.1} parent=47 // pred_fallthru
          _
      $region48: #{tpu_custom_call.1} parent=5 // pred_fallthru
        _
    $region6: #{tpu_custom_call.1} parent=1 // loop_footer
      %s20 = sadd.s32 1, %s16
    $region7: #{tpu_custom_call.1} parent=1 // loop_footer_branch
      %15 = sbr.rel target = $region3
    $region8: #{tpu_custom_call.1} parent=1 // loop_exit
      _
    %651 = vsyncpa [#allocation3], 1
    %s652 = scalar_lea.sflag [#allocation3], 1
    %653 = vsyncpa %s652, 1
    %654 = vsyncpa [#allocation6], 1
    %s655 = scalar_lea.sflag [#allocation6], 1
    %656 = vsyncpa %s655, 1
    %657 = vsyncpa [#allocation4], 1
    %s658 = scalar_lea.sflag [#allocation4], 1
    %659 = vsyncpa %s658, 1

</llo_original>
